<compile_context>
chip_gen: v5e
topology: v5e:2x2
jax: 0.10.0
libtpu: 0.0.40
codegen_flags: <defaults>
</compile_context>

<pallas_src>
import functools
import math

import jax
import jax.numpy as jnp
from jax import lax
from jax.experimental import pallas as pl
from jax.experimental.pallas import tpu as pltpu


def _round_up(v, m):
    return (v + m - 1) // m * m


def _gelu(x, approximate):
    if approximate:
        # tanh form -> transcendental lands on the (otherwise idle) EUP slot.
        c = math.sqrt(2.0 / math.pi)
        return 0.5 * x * (1.0 + jnp.tanh(c * (x + 0.044715 * x * x * x)))
    # PyTorch nn.GELU() default = exact erf-based GELU.
    return 0.5 * x * (1.0 + lax.erf(x * (1.0 / math.sqrt(2.0))))


def _speech_embedding_kernel(x_ref, w1_ref, b1_ref, w2_ref, b2_ref,
                             w3_ref, b3_ref, o_ref, *, approximate_gelu):
    # x tile and weights are bf16; every matmul accumulates in f32 on the MXU.
    x = x_ref[...]

    h = jnp.dot(x, w1_ref[...], preferred_element_type=jnp.float32)
    h = _gelu(h + b1_ref[...], approximate_gelu)

    h = jnp.dot(h.astype(jnp.bfloat16), w2_ref[...],
                preferred_element_type=jnp.float32)
    h = _gelu(h + b2_ref[...], approximate_gelu)

    h = jnp.dot(h.astype(jnp.bfloat16), w3_ref[...],
                preferred_element_type=jnp.float32)
    o_ref[...] = (h + b3_ref[...]).astype(o_ref.dtype)


@functools.partial(jax.jit, static_argnames=("block_m", "approximate_gelu"))
def speech_embedding(x, params, block_m=None, approximate_gelu=False):
    """x: [..., mel_dim] float32. params: dict of w1,b1,w2,b2,w3,b3 ([in,out] weights)."""
    *lead, mel_dim = x.shape
    feature_dim = params["w1"].shape[1]
    x2d = x.reshape(-1, mel_dim)
    n = x2d.shape[0]

    LANE = 128
    mel_p = _round_up(mel_dim, LANE)
    feat_p = _round_up(feature_dim, LANE)

    # Zero-pad feature dims to full 128-lane vregs; cast matmul operands to bf16
    # (MXU native).  Biases stay f32 (added to the f32 accumulator).
    # (In production, pre-pad / pre-cast the weights once instead of per call.)
    def pad2(a, rows, cols):
        return jnp.pad(a, ((0, rows - a.shape[0]), (0, cols - a.shape[1])))

    xp = pad2(x2d, n, mel_p).astype(jnp.bfloat16)
    w1 = pad2(params["w1"], mel_p, feat_p).astype(jnp.bfloat16)
    w2 = pad2(params["w2"], feat_p, feat_p).astype(jnp.bfloat16)
    w3 = pad2(params["w3"], feat_p, feat_p).astype(jnp.bfloat16)
    b1 = pad2(params["b1"], 1, feat_p).astype(jnp.float32)
    b2 = pad2(params["b2"], 1, feat_p).astype(jnp.float32)
    b3 = pad2(params["b3"], 1, feat_p).astype(jnp.float32)

    if block_m is None:
        if n <= 8:
            block_m = n                            # one tiny (full-dim) block
        elif n >= 1024:
            block_m = 512                          # 256-aligned for the v6e/v7x MXU edge
        else:
            block_m = _round_up(pl.cdiv(n, 2), 8)  # >=2 grid steps: pipelining + v7x megacore

    grid = (pl.cdiv(n, block_m),)

    # Grid-invariant operands: whole-array resident in VMEM (single copy, no per-step
    # streaming / double-buffering of the weights).
    # TODO(synk): for feature_dim >~ 4096 (bf16) w2/w3 no longer fit v7x's 64 MiB VMEM;
    # add a K-reduction grid axis ("arbitrary") with an f32 VMEM accumulator scratch
    # instead of full weight residency.
    def resident():
        return pl.BlockSpec(memory_space=pltpu.MemorySpace.VMEM)

    weight_bytes = (mel_p * feat_p + 2 * feat_p * feat_p) * 2 + 3 * feat_p * 4
    stream_bytes = 2 * (block_m * mel_p * 2 + block_m * feat_p * 4)  # 2x-buffered x/out tiles
    act_bytes = 4 * block_m * feat_p * 4
    vmem_limit = int(min(max(weight_bytes + stream_bytes + act_bytes + (4 << 20),
                             32 << 20), 56 << 20))

    kernel = functools.partial(_speech_embedding_kernel,
                               approximate_gelu=approximate_gelu)

    out = pl.pallas_call(
        kernel,
        out_shape=jax.ShapeDtypeStruct((n, feat_p), jnp.float32),
        grid_spec=pltpu.PrefetchScalarGridSpec(
            num_scalar_prefetch=0,
            grid=grid,
            in_specs=[
                pl.BlockSpec((block_m, mel_p), lambda i: (i, 0)),   # x row tile (pipelined)
                resident(),  # w1
                resident(),  # b1
                resident(),  # w2
                resident(),  # b2
                resident(),  # w3
                resident(),  # b3
            ],
            out_specs=pl.BlockSpec((block_m, feat_p), lambda i: (i, 0)),
        ),
        compiler_params=pltpu.CompilerParams(
            dimension_semantics=("parallel",),
            vmem_limit_bytes=vmem_limit,
        ),
    )(xp, w1, b1, w2, b2, w3, b3)

    out = out[:, :feature_dim]
    return out.reshape(*lead, feature_dim)


def init_params(key, mel_dim, feature_dim, dtype=jnp.float32):
    """PyTorch nn.Linear default init: U(-1/sqrt(in_dim), 1/sqrt(in_dim))."""
    keys = jax.random.split(key, 6)

    def lin(kw, kb, in_dim, out_dim):
        bound = 1.0 / math.sqrt(in_dim)
        w = jax.random.uniform(kw, (in_dim, out_dim), dtype, -bound, bound)  # pre-transposed
        b = jax.random.uniform(kb, (1, out_dim), dtype, -bound, bound)
        return w, b

    w1, b1 = lin(keys[0], keys[1], mel_dim, feature_dim)
    w2, b2 = lin(keys[2], keys[3], feature_dim, feature_dim)
    w3, b3 = lin(keys[4], keys[5], feature_dim, feature_dim)
    return {"w1": w1, "b1": b1, "w2": w2, "b2": b2, "w3": w3, "b3": b3}


def reference(x, p):
    h = _gelu(x @ p["w1"] + p["b1"], False)
    h = _gelu(h @ p["w2"] + p["b2"], False)
    return h @ p["w3"] + p["b3"]


if __name__ == "__main__":
    key = jax.random.PRNGKey(0)
    k_x, k_p = jax.random.split(key)

    batch, seq, mel_dim, feature_dim = 2, 8, 40, 32
    x = jax.random.normal(k_x, (batch, seq, mel_dim), dtype=jnp.float32)
    params = init_params(k_p, mel_dim, feature_dim)

    out = speech_embedding(x, params)
    jax.block_until_ready(out)

    ref = reference(x.reshape(-1, mel_dim), params).reshape(batch, seq, feature_dim)
    # bf16 MXU operands (f32 accumulation) -> compare against the f32 reference with a
    # bf16-appropriate tolerance.
    assert out.shape == ref.shape
    max_diff = jnp.max(jnp.abs(out - ref))
    assert jnp.allclose(out, ref, atol=5e-2, rtol=5e-2), f"mismatch vs reference (max |diff| = {max_diff})"
    print("KERNEL_OK")
</pallas_src>

<mosaic_0001>
module attributes {stable_mosaic.version = 11 : i64} {
  func.func @_speech_embedding_kernel(%arg0: i32, %arg1: memref<8x128xbf16, #tpu.memory_space<vmem>>, %arg2: memref<128x128xbf16, #tpu.memory_space<vmem>>, %arg3: memref<1x128xf32, #tpu.memory_space<vmem>>, %arg4: memref<128x128xbf16, #tpu.memory_space<vmem>>, %arg5: memref<1x128xf32, #tpu.memory_space<vmem>>, %arg6: memref<128x128xbf16, #tpu.memory_space<vmem>>, %arg7: memref<1x128xf32, #tpu.memory_space<vmem>>, %arg8: memref<8x128xf32, #tpu.memory_space<vmem>>) attributes {dimension_semantics = [#tpu.dimension_semantics<parallel>], iteration_bounds = array<i64: 2>, scalar_prefetch = 0 : i64, scratch_operands = 0 : i64, tpu.core_type = #tpu.core_type<tc>, window_params = [{transform_indices = @transform_0, window_bounds = array<i64: 8, 128>}, {pipeline_mode = #tpu.pipeline_mode<synchronous>, transform_indices = @transform_1, window_bounds = array<i64: 128, 128>}, {pipeline_mode = #tpu.pipeline_mode<synchronous>, transform_indices = @transform_2, window_bounds = array<i64: 1, 128>}, {pipeline_mode = #tpu.pipeline_mode<synchronous>, transform_indices = @transform_3, window_bounds = array<i64: 128, 128>}, {pipeline_mode = #tpu.pipeline_mode<synchronous>, transform_indices = @transform_4, window_bounds = array<i64: 1, 128>}, {pipeline_mode = #tpu.pipeline_mode<synchronous>, transform_indices = @transform_5, window_bounds = array<i64: 128, 128>}, {pipeline_mode = #tpu.pipeline_mode<synchronous>, transform_indices = @transform_6, window_bounds = array<i64: 1, 128>}, {transform_indices = @transform_7, window_bounds = array<i64: 8, 128>}]} {
    %c0 = arith.constant 0 : index
    %c0_0 = arith.constant 0 : index
    %0 = vector.load %arg1[%c0, %c0_0] : memref<8x128xbf16, #tpu.memory_space<vmem>>, vector<8x128xbf16>
    %c0_1 = arith.constant 0 : index
    %c0_2 = arith.constant 0 : index
    %1 = vector.load %arg2[%c0_1, %c0_2] : memref<128x128xbf16, #tpu.memory_space<vmem>>, vector<128x128xbf16>
    %cst = arith.constant dense<0.000000e+00> : vector<8x128xf32>
    %2 = tpu.matmul %0, %1, %cst {dimension_numbers = #tpu.dot_dimension_numbers<[1], [0], [0], [1], [0, 0, 1, 1], [], []>} : vector<8x128xbf16>, vector<128x128xbf16>, vector<8x128xf32> -> vector<8x128xf32>
    %c0_3 = arith.constant 0 : index
    %c0_4 = arith.constant 0 : index
    %3 = vector.load %arg3[%c0_3, %c0_4] : memref<1x128xf32, #tpu.memory_space<vmem>>, vector<1x128xf32>
    %4 = vector.broadcast %3 : vector<1x128xf32> to vector<8x128xf32>
    %5 = arith.addf %2, %4 : vector<8x128xf32>
    %cst_5 = arith.constant 5.000000e-01 : f32
    %6 = vector.broadcast %cst_5 : f32 to vector<8x128xf32>
    %7 = arith.mulf %6, %5 : vector<8x128xf32>
    %cst_6 = arith.constant 0.707106769 : f32
    %8 = vector.broadcast %cst_6 : f32 to vector<8x128xf32>
    %9 = arith.mulf %5, %8 : vector<8x128xf32>
    %10 = math.erf %9 : vector<8x128xf32>
    %cst_7 = arith.constant 1.000000e+00 : f32
    %11 = vector.broadcast %cst_7 : f32 to vector<8x128xf32>
    %12 = arith.addf %11, %10 : vector<8x128xf32>
    %13 = arith.mulf %7, %12 : vector<8x128xf32>
    %14 = arith.truncf %13 : vector<8x128xf32> to vector<8x128xbf16>
    %c0_8 = arith.constant 0 : index
    %c0_9 = arith.constant 0 : index
    %15 = vector.load %arg4[%c0_8, %c0_9] : memref<128x128xbf16, #tpu.memory_space<vmem>>, vector<128x128xbf16>
    %cst_10 = arith.constant dense<0.000000e+00> : vector<8x128xf32>
    %16 = tpu.matmul %14, %15, %cst_10 {dimension_numbers = #tpu.dot_dimension_numbers<[1], [0], [0], [1], [0, 0, 1, 1], [], []>} : vector<8x128xbf16>, vector<128x128xbf16>, vector<8x128xf32> -> vector<8x128xf32>
    %c0_11 = arith.constant 0 : index
    %c0_12 = arith.constant 0 : index
    %17 = vector.load %arg5[%c0_11, %c0_12] : memref<1x128xf32, #tpu.memory_space<vmem>>, vector<1x128xf32>
    %18 = vector.broadcast %17 : vector<1x128xf32> to vector<8x128xf32>
    %19 = arith.addf %16, %18 : vector<8x128xf32>
    %cst_13 = arith.constant 5.000000e-01 : f32
    %20 = vector.broadcast %cst_13 : f32 to vector<8x128xf32>
    %21 = arith.mulf %20, %19 : vector<8x128xf32>
    %cst_14 = arith.constant 0.707106769 : f32
    %22 = vector.broadcast %cst_14 : f32 to vector<8x128xf32>
    %23 = arith.mulf %19, %22 : vector<8x128xf32>
    %24 = math.erf %23 : vector<8x128xf32>
    %cst_15 = arith.constant 1.000000e+00 : f32
    %25 = vector.broadcast %cst_15 : f32 to vector<8x128xf32>
    %26 = arith.addf %25, %24 : vector<8x128xf32>
    %27 = arith.mulf %21, %26 : vector<8x128xf32>
    %28 = arith.truncf %27 : vector<8x128xf32> to vector<8x128xbf16>
    %c0_16 = arith.constant 0 : index
    %c0_17 = arith.constant 0 : index
    %29 = vector.load %arg6[%c0_16, %c0_17] : memref<128x128xbf16, #tpu.memory_space<vmem>>, vector<128x128xbf16>
    %cst_18 = arith.constant dense<0.000000e+00> : vector<8x128xf32>
    %30 = tpu.matmul %28, %29, %cst_18 {dimension_numbers = #tpu.dot_dimension_numbers<[1], [0], [0], [1], [0, 0, 1, 1], [], []>} : vector<8x128xbf16>, vector<128x128xbf16>, vector<8x128xf32> -> vector<8x128xf32>
    %c0_19 = arith.constant 0 : index
    %c0_20 = arith.constant 0 : index
    %31 = vector.load %arg7[%c0_19, %c0_20] : memref<1x128xf32, #tpu.memory_space<vmem>>, vector<1x128xf32>
    %32 = vector.broadcast %31 : vector<1x128xf32> to vector<8x128xf32>
    %33 = arith.addf %30, %32 : vector<8x128xf32>
    %c0_21 = arith.constant 0 : index
    %c0_22 = arith.constant 0 : index
    %34 = vector.load %arg8[%c0_21, %c0_22] : memref<8x128xf32, #tpu.memory_space<vmem>>, vector<8x128xf32>
    tpu.vector_store %arg8[%c0_21, %c0_22], %33 {strides = array<i32>} : memref<8x128xf32, #tpu.memory_space<vmem>>, vector<8x128xf32>,
    return
  }
  func.func @transform_0(%arg0: i32) -> (i32, i32) {
    %c0_i32 = arith.constant 0 : i32
    %c0_i32_0 = arith.constant 0 : i32
    return %arg0, %c0_i32 : i32, i32
  }
  func.func @transform_1(%arg0: i32) -> (i32, i32) {
    %c0_i32 = arith.constant 0 : i32
    %c0_i32_0 = arith.constant 0 : i32
    %c0_i32_1 = arith.constant 0 : i32
    return %c0_i32, %c0_i32_0 : i32, i32
  }
  func.func @transform_2(%arg0: i32) -> (i32, i32) {
    %c0_i32 = arith.constant 0 : i32
    %c0_i32_0 = arith.constant 0 : i32
    %c0_i32_1 = arith.constant 0 : i32
    return %c0_i32, %c0_i32_0 : i32, i32
  }
  func.func @transform_3(%arg0: i32) -> (i32, i32) {
    %c0_i32 = arith.constant 0 : i32
    %c0_i32_0 = arith.constant 0 : i32
    %c0_i32_1 = arith.constant 0 : i32
    return %c0_i32, %c0_i32_0 : i32, i32
  }
  func.func @transform_4(%arg0: i32) -> (i32, i32) {
    %c0_i32 = arith.constant 0 : i32
    %c0_i32_0 = arith.constant 0 : i32
    %c0_i32_1 = arith.constant 0 : i32
    return %c0_i32, %c0_i32_0 : i32, i32
  }
  func.func @transform_5(%arg0: i32) -> (i32, i32) {
    %c0_i32 = arith.constant 0 : i32
    %c0_i32_0 = arith.constant 0 : i32
    %c0_i32_1 = arith.constant 0 : i32
    return %c0_i32, %c0_i32_0 : i32, i32
  }
  func.func @transform_6(%arg0: i32) -> (i32, i32) {
    %c0_i32 = arith.constant 0 : i32
    %c0_i32_0 = arith.constant 0 : i32
    %c0_i32_1 = arith.constant 0 : i32
    return %c0_i32, %c0_i32_0 : i32, i32
  }
  func.func @transform_7(%arg0: i32) -> (i32, i32) {
    %c0_i32 = arith.constant 0 : i32
    %c0_i32_0 = arith.constant 0 : i32
    return %arg0, %c0_i32 : i32, i32
  }
}

</mosaic_0001>

<llo_original>
// kernel: speech_embedding.1
$region0: #{speech_embedding.1}
  #allocation0 [shape = 'u32[]', space=smem, size = 0x4, offset = 0x4, fixed_abs, tag = 'smem constant byte address 0x4 - core index']
  #allocation1 [shape = 'u32[72,128]{1,0:T(1,128)}', space=vmem, size = 0x9000, scoped, tag = 'internal scratch']
  %s0 = inlined_call_operand.vmem [shape: bf16[16,128], index: 0, kind: input, shape index: {}]
  %s1 = inlined_call_operand.vmem [shape: bf16[128,128], index: 1, kind: input, shape index: {}]
  %s2 = inlined_call_operand.vmem [shape: f32[1,128], index: 2, kind: input, shape index: {}]
  %s3 = inlined_call_operand.vmem [shape: bf16[128,128], index: 3, kind: input, shape index: {}]
  %s4 = inlined_call_operand.vmem [shape: f32[1,128], index: 4, kind: input, shape index: {}]
  %s5 = inlined_call_operand.vmem [shape: bf16[128,128], index: 5, kind: input, shape index: {}]
  %s6 = inlined_call_operand.vmem [shape: f32[1,128], index: 6, kind: input, shape index: {}]
  %s7 = inlined_call_operand.vmem [shape: f32[16,128], index: 7, kind: output, shape index: {}]
  %s8 = sld [smem:[#allocation0]]
  $region61: #{speech_embedding.1} parent=0
    _
  %s10 = ssub.s32 1, %s8
  %s11 = scalar_select 0, %s10, %s8
  loop: start=0, step=1, limit=4
  $region2: #{speech_embedding.1} parent=0 // loop_pre_header
    _
  $region3: #{speech_embedding.1} parent=0 // loop_header
    %s13 = sphi 0, %s17
    %p14 = scmp.ge.s32.totalorder %s13, 4
    %s23 = sphi 0, %s25
    %s26 = sphi 0, %s23
    %s27 = sphi 0, %s26
    %s43 = sphi 0, %s27
    %s47 = sphi 0, %s47
    %s49 = sphi 0, %s47
    %s50 = sphi 0, %s49
    %s64 = sphi 0, %s50
    %s68 = sphi 0, %s68
    %s70 = sphi 0, %s68
    %s71 = sphi 0, %s70
    %s85 = sphi 0, %s71
    %s89 = sphi 0, %s89
    %s91 = sphi 0, %s89
    %s92 = sphi 0, %s91
    %s106 = sphi 0, %s92
    %s110 = sphi 0, %s110
    %s112 = sphi 0, %s110
    %s113 = sphi 0, %s112
    %s127 = sphi 0, %s113
    %s131 = sphi 0, %s131
    %s133 = sphi 0, %s131
    %s134 = sphi 0, %s133
    %s148 = sphi 0, %s134
    %s152 = sphi 0, %s152
    %s154 = sphi 0, %s152
    %s155 = sphi 0, %s154
    %s169 = sphi 0, %s155
    %s175 = sphi 0, %s177
    %s178 = sphi 0, %s175
    %s179 = sphi 0, %s178
    %s195 = sphi 0, %s179
  $region4: #{speech_embedding.1} parent=0 // loop_header_branch
    %16 = sbr.rel (%p14) target = $region8
  $region5: #{speech_embedding.1} parent=0 // loop_body
    %s18 = ssub.s32 %s13, 1
    %s19 = ssub.s32 %s13, 2
    %s20 = sadd.s32 %s13, 1
    %s21 = ssub.s32 %s13, %s20
    %p22 = scmp.eq.s32.totalorder %s21, 0
    %s24 = sadd.s32 %s23, 1
    %s25 = scalar_select %p22, %s23, %s24
    %p28 = pneg %p22
    %p29 = scmp.eq.s32.totalorder %s13, 1
    %p30 = por %p28, %p29
    %p31 = scmp.ne.s32.totalorder %s23, %s26
    %p32 = scmp.eq.s32.totalorder %s13, 0
    %p33 = por %p31, %p32
    %p34 = scmp.ne.s32.totalorder %s23, %s26
    %p35 = scmp.eq.s32.totalorder %s18, 1
    %p36 = por %p34, %p35
    %p37 = scmp.ne.s32.totalorder %s26, %s27
    %p38 = scmp.eq.s32.totalorder %s18, 0
    %p39 = por %p37, %p38
    %p40 = scmp.ne.s32.totalorder %s26, %s27
    %p41 = scmp.eq.s32.totalorder %s19, 1
    %p42 = por %p40, %p41
    %p44 = scmp.ne.s32.totalorder %s27, %s43
    %p45 = scmp.eq.s32.totalorder %s19, 0
    %p46 = por %p44, %p45
    %s48 = sadd.s32 %s47, 1
    %p51 = scmp.eq.s32.totalorder %s13, 1
    %p52 = scmp.ne.s32.totalorder %s47, %s49
    %p53 = scmp.eq.s32.totalorder %s13, 0
    %p54 = por %p52, %p53
    %p55 = scmp.ne.s32.totalorder %s47, %s49
    %p56 = scmp.eq.s32.totalorder %s18, 1
    %p57 = por %p55, %p56
    %p58 = scmp.ne.s32.totalorder %s49, %s50
    %p59 = scmp.eq.s32.totalorder %s18, 0
    %p60 = por %p58, %p59
    %p61 = scmp.ne.s32.totalorder %s49, %s50
    %p62 = scmp.eq.s32.totalorder %s19, 1
    %p63 = por %p61, %p62
    %p65 = scmp.ne.s32.totalorder %s50, %s64
    %p66 = scmp.eq.s32.totalorder %s19, 0
    %p67 = por %p65, %p66
    %s69 = sadd.s32 %s68, 1
    %p72 = scmp.eq.s32.totalorder %s13, 1
    %p73 = scmp.ne.s32.totalorder %s68, %s70
    %p74 = scmp.eq.s32.totalorder %s13, 0
    %p75 = por %p73, %p74
    %p76 = scmp.ne.s32.totalorder %s68, %s70
    %p77 = scmp.eq.s32.totalorder %s18, 1
    %p78 = por %p76, %p77
    %p79 = scmp.ne.s32.totalorder %s70, %s71
    %p80 = scmp.eq.s32.totalorder %s18, 0
    %p81 = por %p79, %p80
    %p82 = scmp.ne.s32.totalorder %s70, %s71
    %p83 = scmp.eq.s32.totalorder %s19, 1
    %p84 = por %p82, %p83
    %p86 = scmp.ne.s32.totalorder %s71, %s85
    %p87 = scmp.eq.s32.totalorder %s19, 0
    %p88 = por %p86, %p87
    %s90 = sadd.s32 %s89, 1
    %p93 = scmp.eq.s32.totalorder %s13, 1
    %p94 = scmp.ne.s32.totalorder %s89, %s91
    %p95 = scmp.eq.s32.totalorder %s13, 0
    %p96 = por %p94, %p95
    %p97 = scmp.ne.s32.totalorder %s89, %s91
    %p98 = scmp.eq.s32.totalorder %s18, 1
    %p99 = por %p97, %p98
    %p100 = scmp.ne.s32.totalorder %s91, %s92
    %p101 = scmp.eq.s32.totalorder %s18, 0
    %p102 = por %p100, %p101
    %p103 = scmp.ne.s32.totalorder %s91, %s92
    %p104 = scmp.eq.s32.totalorder %s19, 1
    %p105 = por %p103, %p104
    %p107 = scmp.ne.s32.totalorder %s92, %s106
    %p108 = scmp.eq.s32.totalorder %s19, 0
    %p109 = por %p107, %p108
    %s111 = sadd.s32 %s110, 1
    %p114 = scmp.eq.s32.totalorder %s13, 1
    %p115 = scmp.ne.s32.totalorder %s110, %s112
    %p116 = scmp.eq.s32.totalorder %s13, 0
    %p117 = por %p115, %p116
    %p118 = scmp.ne.s32.totalorder %s110, %s112
    %p119 = scmp.eq.s32.totalorder %s18, 1
    %p120 = por %p118, %p119
    %p121 = scmp.ne.s32.totalorder %s112, %s113
    %p122 = scmp.eq.s32.totalorder %s18, 0
    %p123 = por %p121, %p122
    %p124 = scmp.ne.s32.totalorder %s112, %s113
    %p125 = scmp.eq.s32.totalorder %s19, 1
    %p126 = por %p124, %p125
    %p128 = scmp.ne.s32.totalorder %s113, %s127
    %p129 = scmp.eq.s32.totalorder %s19, 0
    %p130 = por %p128, %p129
    %s132 = sadd.s32 %s131, 1
    %p135 = scmp.eq.s32.totalorder %s13, 1
    %p136 = scmp.ne.s32.totalorder %s131, %s133
    %p137 = scmp.eq.s32.totalorder %s13, 0
    %p138 = por %p136, %p137
    %p139 = scmp.ne.s32.totalorder %s131, %s133
    %p140 = scmp.eq.s32.totalorder %s18, 1
    %p141 = por %p139, %p140
    %p142 = scmp.ne.s32.totalorder %s133, %s134
    %p143 = scmp.eq.s32.totalorder %s18, 0
    %p144 = por %p142, %p143
    %p145 = scmp.ne.s32.totalorder %s133, %s134
    %p146 = scmp.eq.s32.totalorder %s19, 1
    %p147 = por %p145, %p146
    %p149 = scmp.ne.s32.totalorder %s134, %s148
    %p150 = scmp.eq.s32.totalorder %s19, 0
    %p151 = por %p149, %p150
    %s153 = sadd.s32 %s152, 1
    %p156 = scmp.eq.s32.totalorder %s13, 1
    %p157 = scmp.ne.s32.totalorder %s152, %s154
    %p158 = scmp.eq.s32.totalorder %s13, 0
    %p159 = por %p157, %p158
    %p160 = scmp.ne.s32.totalorder %s152, %s154
    %p161 = scmp.eq.s32.totalorder %s18, 1
    %p162 = por %p160, %p161
    %p163 = scmp.ne.s32.totalorder %s154, %s155
    %p164 = scmp.eq.s32.totalorder %s18, 0
    %p165 = por %p163, %p164
    %p166 = scmp.ne.s32.totalorder %s154, %s155
    %p167 = scmp.eq.s32.totalorder %s19, 1
    %p168 = por %p166, %p167
    %p170 = scmp.ne.s32.totalorder %s155, %s169
    %p171 = scmp.eq.s32.totalorder %s19, 0
    %p172 = por %p170, %p171
    %s173 = ssub.s32 %s13, %s20
    %p174 = scmp.eq.s32.totalorder %s173, 0
    %s176 = sadd.s32 %s175, 1
    %s177 = scalar_select %p174, %s175, %s176
    %p180 = pneg %p174
    %p181 = scmp.eq.s32.totalorder %s13, 1
    %p182 = por %p180, %p181
    %p183 = scmp.ne.s32.totalorder %s175, %s178
    %p184 = scmp.eq.s32.totalorder %s13, 0
    %p185 = por %p183, %p184
    %p186 = scmp.ne.s32.totalorder %s175, %s178
    %p187 = scmp.eq.s32.totalorder %s18, 1
    %p188 = por %p186, %p187
    %p189 = scmp.ne.s32.totalorder %s178, %s179
    %p190 = scmp.eq.s32.totalorder %s18, 0
    %p191 = por %p189, %p190
    %p192 = scmp.ne.s32.totalorder %s178, %s179
    %p193 = scmp.eq.s32.totalorder %s19, 1
    %p194 = por %p192, %p193
    %p196 = scmp.ne.s32.totalorder %s179, %s195
    %p197 = scmp.eq.s32.totalorder %s19, 0
    %p198 = por %p196, %p197
    %p199 = scmp.le.s32.totalorder 1, %s13
    %p200 = scmp.lt.s32.totalorder %s13, 3
    %p201 = pnand %p199, %p200
    %p202 = pneg %p201
    // Predicated region
    $region9: #{speech_embedding.1} parent=5 // pred_check
      _
    $region10: #{speech_embedding.1} parent=5 // pred_check_branch
      %204 = sbr.rel (%p201) target = $region12
    $region11: #{speech_embedding.1} parent=5 // pred_region
      %s205 = ssub.s32 %s13, 1
      // Predicated region
      $region13: #{speech_embedding.1} parent=11 // pred_check
        %p206 = pneg %p60
      $region14: #{speech_embedding.1} parent=11 // pred_check_branch
        %208 = sbr.rel (%p206) target = $region16
      $region15: #{speech_embedding.1} parent=11 // pred_region
        _
      $region16: #{speech_embedding.1} parent=11 // pred_fallthru
        _
      // Predicated region
      $region17: #{speech_embedding.1} parent=11 // pred_check
        %p209 = pneg %p81
      $region18: #{speech_embedding.1} parent=11 // pred_check_branch
        %211 = sbr.rel (%p209) target = $region20
      $region19: #{speech_embedding.1} parent=11 // pred_region
        _
      $region20: #{speech_embedding.1} parent=11 // pred_fallthru
        _
      // Predicated region
      $region21: #{speech_embedding.1} parent=11 // pred_check
        %p212 = pneg %p102
      $region22: #{speech_embedding.1} parent=11 // pred_check_branch
        %214 = sbr.rel (%p212) target = $region24
      $region23: #{speech_embedding.1} parent=11 // pred_region
        _
      $region24: #{speech_embedding.1} parent=11 // pred_fallthru
        _
      // Predicated region
      $region25: #{speech_embedding.1} parent=11 // pred_check
        %p215 = pneg %p123
      $region26: #{speech_embedding.1} parent=11 // pred_check_branch
        %217 = sbr.rel (%p215) target = $region28
      $region27: #{speech_embedding.1} parent=11 // pred_region
        _
      $region28: #{speech_embedding.1} parent=11 // pred_fallthru
        _
      // Predicated region
      $region29: #{speech_embedding.1} parent=11 // pred_check
        %p218 = pneg %p144
      $region30: #{speech_embedding.1} parent=11 // pred_check_branch
        %220 = sbr.rel (%p218) target = $region32
      $region31: #{speech_embedding.1} parent=11 // pred_region
        _
      $region32: #{speech_embedding.1} parent=11 // pred_fallthru
        _
      // Predicated region
      $region33: #{speech_embedding.1} parent=11 // pred_check
        %p221 = pneg %p165
      $region34: #{speech_embedding.1} parent=11 // pred_check_branch
        %223 = sbr.rel (%p221) target = $region36
      $region35: #{speech_embedding.1} parent=11 // pred_region
        _
      $region36: #{speech_embedding.1} parent=11 // pred_fallthru
        _
    $region12: #{speech_embedding.1} parent=5 // pred_fallthru
      _
    %p224 = scmp.lt.s32.totalorder %s13, 2
    // Predicated region
    $region37: #{speech_embedding.1} parent=5 // pred_check
      %p225 = pneg %p224
    $region38: #{speech_embedding.1} parent=5 // pred_check_branch
      %227 = sbr.rel (%p225) target = $region40
    $region39: #{speech_embedding.1} parent=5 // pred_region
      // Predicated region
      $region41: #{speech_embedding.1} parent=39 // pred_check
        %p228 = pneg %p33
      $region42: #{speech_embedding.1} parent=39 // pred_check_branch
        %230 = sbr.rel (%p228) target = $region44
      $region43: #{speech_embedding.1} parent=39 // pred_region
        %p231 = scmp.lt.s32.totalorder %s13, 1
        %s232 = scalar_select %p231, %s13, 1
        %s233 = smul.addr %s232, 4
        %s234 = scalar_lea.vmem %s0, %s233
      $region44: #{speech_embedding.1} parent=39 // pred_fallthru
        _
    $region40: #{speech_embedding.1} parent=5 // pred_fallthru
      _
    %p235 = scmp.le.s32.totalorder 1, %s13
    %p236 = scmp.lt.s32.totalorder %s13, 3
    %p237 = pnand %p235, %p236
    %p238 = pneg %p237
    // Predicated region
    $region45: #{speech_embedding.1} parent=5 // pred_check
      _
    $region46: #{speech_embedding.1} parent=5 // pred_check_branch
      %240 = sbr.rel (%p237) target = $region48
    $region47: #{speech_embedding.1} parent=5 // pred_region
      %s241 = ssub.s32 %s13, 1
      %p242 = scmp.lt.s32.totalorder %s18, 1
      %s243 = scalar_select %p242, %s18, 1
      %s244 = smul.addr %s243, 4
      %s245 = scalar_lea.vmem %s0, %s244
      %p246 = pneg %p39
      %p247 = pneg %p36
      %p248 = pneg %p60
      %p249 = pneg %p57
      %p250 = pneg %p81
      %p251 = pneg %p78
      %p252 = pneg %p102
      %p253 = pneg %p99
      %p254 = pneg %p123
      %p255 = pneg %p120
      %p256 = pneg %p144
      %p257 = pneg %p141
      %p258 = pneg %p165
      %p259 = pneg %p162
      %p260 = pneg %p191
      %p261 = pneg %p188
      %p262 = scmp.lt.s32.totalorder %s18, 1
      %s263 = scalar_select %p262, %s18, 1
      %s264 = smul.addr %s263, 8
      %s265 = scalar_lea.vmem %s7, %s264
      %p266 = scmp.lt.s32.totalorder %s18, 1
      %s267 = scalar_select %p266, %s18, 1
      %s268 = smul.addr %s267, 4
      %s269 = scalar_lea.vmem %s0, %s268
      %p270 = scmp.lt.s32.totalorder %s18, 1
      %s271 = scalar_select %p270, %s18, 1
      %s272 = smul.addr %s271, 8
      %s273 = scalar_lea.vmem %s7, %s272
      %v274 = vld [vmem:[%s269] sm:$0xf]
      %v275 = vld [vmem:[%s1] sm:$0xf]
      %v276 = vld [vmem:[%s1 + $0x4] sm:$0xf]
      %v277 = vld [vmem:[%s1 + $0x8] sm:$0xf]
      %v278 = vld [vmem:[%s1 + $0xc] sm:$0xf]
      %v279 = vld [vmem:[%s1 + $0x10] sm:$0xf]
      %v280 = vld [vmem:[%s1 + $0x14] sm:$0xf]
      %v281 = vld [vmem:[%s1 + $0x18] sm:$0xf]
      %v282 = vld [vmem:[%s1 + $0x1c] sm:$0xf]
      %v283 = vld [vmem:[%s1 + $0x20] sm:$0xf]
      %v284 = vld [vmem:[%s1 + $0x24] sm:$0xf]
      %v285 = vld [vmem:[%s1 + $0x28] sm:$0xf]
      %v286 = vld [vmem:[%s1 + $0x2c] sm:$0xf]
      %v287 = vld [vmem:[%s1 + $0x30] sm:$0xf]
      %v288 = vld [vmem:[%s1 + $0x34] sm:$0xf]
      %v289 = vld [vmem:[%s1 + $0x38] sm:$0xf]
      %v290 = vld [vmem:[%s1 + $0x3c] sm:$0xf]
      %v291 = vld [vmem:[%s2] sm:$0x1]
      %v293 = vperm.slane %v291, 0
      %v311 = vunpack.c.l.b16 %v275
      %v312 = vunpack.c.l.b16 %v276
      %v313 = vunpack.c.l.b16 %v277
      %v314 = vunpack.c.l.b16 %v278
      %v315 = vunpack.c.l.b16 %v279
      %v316 = vunpack.c.l.b16 %v280
      %v317 = vunpack.c.l.b16 %v281
      %v318 = vunpack.c.l.b16 %v282
      %v319 = vunpack.c.l.b16 %v283
      %v320 = vunpack.c.l.b16 %v284
      %v321 = vunpack.c.l.b16 %v285
      %v322 = vunpack.c.l.b16 %v286
      %v323 = vunpack.c.l.b16 %v287
      %v324 = vunpack.c.l.b16 %v288
      %v325 = vunpack.c.l.b16 %v289
      %v326 = vunpack.c.l.b16 %v290
      %v327 = vpack.c.b16 %v312, %v311
      %v328 = vpack.c.b16 %v314, %v313
      %v329 = vpack.c.b16 %v316, %v315
      %v330 = vpack.c.b16 %v318, %v317
      %v331 = vpack.c.b16 %v320, %v319
      %v332 = vpack.c.b16 %v322, %v321
      %v333 = vpack.c.b16 %v324, %v323
      %v334 = vpack.c.b16 %v326, %v325
      %343 = vmatpush.bf16.msra.mxu0 %v334
      %344 = vmatpush.bf16.msra.mxu0 %v333
      %345 = vmatpush.bf16.msra.mxu0 %v332
      %346 = vmatpush.bf16.msra.mxu0 %v331
      %347 = vmatpush.bf16.msra.mxu0 %v330
      %348 = vmatpush.bf16.msra.mxu0 %v329
      %349 = vmatpush.bf16.msra.mxu0 %v328
      %350 = vmatpush.bf16.msra.mxu0 %v327
      %351 = vmatmul.bf16.gmra.mxu0 %v274
      %v352 = vpop.f32.mrf.mxu0
      %v353 = vadd.f32 %v293, %v352
      %v354 = vpop.f32.mrf.mxu0
      %355 = vdwg.mxu0
      %v356 = vmul.f32 %v353, 0.5
      %v357 = vmul.f32 %v353, 0.70710677
      %v358 = vmul.f32 %v357, %v357
      %v359 = vmin.f32 16.0, %v358
      %v360 = vmul.f32 %v359, 2.1237322e-06
      %v361 = vadd.f32 %v360, 0.00028619796
      %v362 = vmul.f32 %v359, %v361
      %v363 = vadd.f32 %v362, 0.0036580483
      %v364 = vmul.f32 %v359, %v363
      %v365 = vadd.f32 %v364, 0.05243302
      %v366 = vmul.f32 %v359, %v365
      %v367 = vadd.f32 %v366, 0.18741608
      %v368 = vmul.f32 %v359, %v367
      %v369 = vadd.f32 %v368, 1.1283791
      %v370 = vmul.f32 %v357, %v369
      %v371 = vmul.f32 %v359, 3.8918573e-05
      %v372 = vadd.f32 %v371, 0.001143296
      %v373 = vmul.f32 %v359, %v372
      %v374 = vadd.f32 %v373, 0.014752088
      %v375 = vmul.f32 %v359, %v374
      %v376 = vadd.f32 %v375, 0.112945676
      %v377 = vmul.f32 %v359, %v376
      %v378 = vadd.f32 %v377, 0.4994258
      %v379 = vmul.f32 %v359, %v378
      %v380 = vadd.f32 %v379, 1.0
      %v381 = vrcp.pop %v380
      %v382 = vmul.f32 %v380, %v381
      %v383 = vsub.f32 1.0, %v382
      %v384 = vmul.f32 %v381, %v383
      %v385 = vadd.f32 %v381, %v384
      %vm386 = vweird.f32 %v380
      %vm387 = vweird.f32 %v381
      %vm388 = vmor %vm386, %vm387
      %v389 = vsel %vm388, %v381, %v385
      %v390 = vand.u32 2147483647, %v380
      %vm391 = vcmp.eq.f32.partialorder %v390, 8.507059e+37
      %v392 = vand.u32 %v380, 2147483648
      %v393 = vor.u32 1.1754944e-38, %v392
      %v394 = vsel %vm391, %v393, %v389
      %v395 = vmul.f32 %v370, %v394
      %v396 = vmin.f32 %v395, 1.0
      %v397 = vmax.f32 %v396, -1.0
      %v398 = vadd.f32 %v397, 1.0
      %v399 = vmul.f32 %v356, %v398
      %v400 = vpack.c.bf16 %v399, %v399
      %v401 = vld [vmem:[%s3] sm:$0xf]
      %v402 = vld [vmem:[%s3 + $0x4] sm:$0xf]
      %v403 = vld [vmem:[%s3 + $0x8] sm:$0xf]
      %v404 = vld [vmem:[%s3 + $0xc] sm:$0xf]
      %v405 = vld [vmem:[%s3 + $0x10] sm:$0xf]
      %v406 = vld [vmem:[%s3 + $0x14] sm:$0xf]
      %v407 = vld [vmem:[%s3 + $0x18] sm:$0xf]
      %v408 = vld [vmem:[%s3 + $0x1c] sm:$0xf]
      %v409 = vld [vmem:[%s3 + $0x20] sm:$0xf]
      %v410 = vld [vmem:[%s3 + $0x24] sm:$0xf]
      %v411 = vld [vmem:[%s3 + $0x28] sm:$0xf]
      %v412 = vld [vmem:[%s3 + $0x2c] sm:$0xf]
      %v413 = vld [vmem:[%s3 + $0x30] sm:$0xf]
      %v414 = vld [vmem:[%s3 + $0x34] sm:$0xf]
      %v415 = vld [vmem:[%s3 + $0x38] sm:$0xf]
      %v416 = vld [vmem:[%s3 + $0x3c] sm:$0xf]
      %v417 = vld [vmem:[%s4] sm:$0x1]
      %v419 = vperm.slane %v417, 0
      %v437 = vunpack.c.l.b16 %v401
      %v438 = vunpack.c.l.b16 %v402
      %v439 = vunpack.c.l.b16 %v403
      %v440 = vunpack.c.l.b16 %v404
      %v441 = vunpack.c.l.b16 %v405
      %v442 = vunpack.c.l.b16 %v406
      %v443 = vunpack.c.l.b16 %v407
      %v444 = vunpack.c.l.b16 %v408
      %v445 = vunpack.c.l.b16 %v409
      %v446 = vunpack.c.l.b16 %v410
      %v447 = vunpack.c.l.b16 %v411
      %v448 = vunpack.c.l.b16 %v412
      %v449 = vunpack.c.l.b16 %v413
      %v450 = vunpack.c.l.b16 %v414
      %v451 = vunpack.c.l.b16 %v415
      %v452 = vunpack.c.l.b16 %v416
      %v453 = vpack.c.b16 %v438, %v437
      %v454 = vpack.c.b16 %v440, %v439
      %v455 = vpack.c.b16 %v442, %v441
      %v456 = vpack.c.b16 %v444, %v443
      %v457 = vpack.c.b16 %v446, %v445
      %v458 = vpack.c.b16 %v448, %v447
      %v459 = vpack.c.b16 %v450, %v449
      %v460 = vpack.c.b16 %v452, %v451
      %469 = vmatpush.bf16.msra.mxu0 %v460
      %470 = vmatpush.bf16.msra.mxu0 %v459
      %471 = vmatpush.bf16.msra.mxu0 %v458
      %472 = vmatpush.bf16.msra.mxu0 %v457
      %473 = vmatpush.bf16.msra.mxu0 %v456
      %474 = vmatpush.bf16.msra.mxu0 %v455
      %475 = vmatpush.bf16.msra.mxu0 %v454
      %476 = vmatpush.bf16.msra.mxu0 %v453
      %477 = vmatmul.bf16.gmra.mxu0 %v400
      %v478 = vpop.f32.mrf.mxu0
      %v479 = vadd.f32 %v419, %v478
      %v480 = vpop.f32.mrf.mxu0
      %481 = vdwg.mxu0
      %v482 = vmul.f32 %v479, 0.5
      %v483 = vmul.f32 %v479, 0.70710677
      %v484 = vmul.f32 %v483, %v483
      %v485 = vmin.f32 16.0, %v484
      %v486 = vmul.f32 %v485, 2.1237322e-06
      %v487 = vadd.f32 %v486, 0.00028619796
      %v488 = vmul.f32 %v485, %v487
      %v489 = vadd.f32 %v488, 0.0036580483
      %v490 = vmul.f32 %v485, %v489
      %v491 = vadd.f32 %v490, 0.05243302
      %v492 = vmul.f32 %v485, %v491
      %v493 = vadd.f32 %v492, 0.18741608
      %v494 = vmul.f32 %v485, %v493
      %v495 = vadd.f32 %v494, 1.1283791
      %v496 = vmul.f32 %v483, %v495
      %v497 = vmul.f32 %v485, 3.8918573e-05
      %v498 = vadd.f32 %v497, 0.001143296
      %v499 = vmul.f32 %v485, %v498
      %v500 = vadd.f32 %v499, 0.014752088
      %v501 = vmul.f32 %v485, %v500
      %v502 = vadd.f32 %v501, 0.112945676
      %v503 = vmul.f32 %v485, %v502
      %v504 = vadd.f32 %v503, 0.4994258
      %v505 = vmul.f32 %v485, %v504
      %v506 = vadd.f32 %v505, 1.0
      %v507 = vrcp.pop %v506
      %v508 = vmul.f32 %v506, %v507
      %v509 = vsub.f32 1.0, %v508
      %v510 = vmul.f32 %v507, %v509
      %v511 = vadd.f32 %v507, %v510
      %vm512 = vweird.f32 %v506
      %vm513 = vweird.f32 %v507
      %vm514 = vmor %vm512, %vm513
      %v515 = vsel %vm514, %v507, %v511
      %v516 = vand.u32 2147483647, %v506
      %vm517 = vcmp.eq.f32.partialorder %v516, 8.507059e+37
      %v518 = vand.u32 %v506, 2147483648
      %v519 = vor.u32 1.1754944e-38, %v518
      %v520 = vsel %vm517, %v519, %v515
      %v521 = vmul.f32 %v496, %v520
      %v522 = vmin.f32 %v521, 1.0
      %v523 = vmax.f32 %v522, -1.0
      %v524 = vadd.f32 %v523, 1.0
      %v525 = vmul.f32 %v482, %v524
      %v526 = vpack.c.bf16 %v525, %v525
      %v527 = vld [vmem:[%s5] sm:$0xf]
      %v528 = vld [vmem:[%s5 + $0x4] sm:$0xf]
      %v529 = vld [vmem:[%s5 + $0x8] sm:$0xf]
      %v530 = vld [vmem:[%s5 + $0xc] sm:$0xf]
      %v531 = vld [vmem:[%s5 + $0x10] sm:$0xf]
      %v532 = vld [vmem:[%s5 + $0x14] sm:$0xf]
      %v533 = vld [vmem:[%s5 + $0x18] sm:$0xf]
      %v534 = vld [vmem:[%s5 + $0x1c] sm:$0xf]
      %v535 = vld [vmem:[%s5 + $0x20] sm:$0xf]
      %v536 = vld [vmem:[%s5 + $0x24] sm:$0xf]
      %v537 = vld [vmem:[%s5 + $0x28] sm:$0xf]
      %v538 = vld [vmem:[%s5 + $0x2c] sm:$0xf]
      %v539 = vld [vmem:[%s5 + $0x30] sm:$0xf]
      %v540 = vld [vmem:[%s5 + $0x34] sm:$0xf]
      %v541 = vld [vmem:[%s5 + $0x38] sm:$0xf]
      %v542 = vld [vmem:[%s5 + $0x3c] sm:$0xf]
      %v543 = vld [vmem:[%s6] sm:$0x1]
      %v545 = vperm.slane %v543, 0
      %v563 = vunpack.c.l.b16 %v527
      %v564 = vunpack.c.l.b16 %v528
      %v565 = vunpack.c.l.b16 %v529
      %v566 = vunpack.c.l.b16 %v530
      %v567 = vunpack.c.l.b16 %v531
      %v568 = vunpack.c.l.b16 %v532
      %v569 = vunpack.c.l.b16 %v533
      %v570 = vunpack.c.l.b16 %v534
      %v571 = vunpack.c.l.b16 %v535
      %v572 = vunpack.c.l.b16 %v536
      %v573 = vunpack.c.l.b16 %v537
      %v574 = vunpack.c.l.b16 %v538
      %v575 = vunpack.c.l.b16 %v539
      %v576 = vunpack.c.l.b16 %v540
      %v577 = vunpack.c.l.b16 %v541
      %v578 = vunpack.c.l.b16 %v542
      %v579 = vpack.c.b16 %v564, %v563
      %v580 = vpack.c.b16 %v566, %v565
      %v581 = vpack.c.b16 %v568, %v567
      %v582 = vpack.c.b16 %v570, %v569
      %v583 = vpack.c.b16 %v572, %v571
      %v584 = vpack.c.b16 %v574, %v573
      %v585 = vpack.c.b16 %v576, %v575
      %v586 = vpack.c.b16 %v578, %v577
      %595 = vmatpush.bf16.msra.mxu0 %v586
      %596 = vmatpush.bf16.msra.mxu0 %v585
      %597 = vmatpush.bf16.msra.mxu0 %v584
      %598 = vmatpush.bf16.msra.mxu0 %v583
      %599 = vmatpush.bf16.msra.mxu0 %v582
      %600 = vmatpush.bf16.msra.mxu0 %v581
      %601 = vmatpush.bf16.msra.mxu0 %v580
      %602 = vmatpush.bf16.msra.mxu0 %v579
      %603 = vmatmul.bf16.gmra.mxu0 %v526
      %v604 = vpop.f32.mrf.mxu0
      %v605 = vadd.f32 %v545, %v604
      %v606 = vpop.f32.mrf.mxu0
      %607 = vdwg.mxu0
      %608 = vst [vmem:[%s273] sm:$0xff] %v605
      %p609 = scmp.lt.s32.totalorder %s18, 1
      %s610 = scalar_select %p609, %s18, 1
      %s611 = smul.addr %s610, 8
      %s612 = scalar_lea.vmem %s7, %s611
      // Predicated region
      $region49: #{speech_embedding.1} parent=47 // pred_check
        %p613 = pneg %p188
      $region50: #{speech_embedding.1} parent=47 // pred_check_branch
        %615 = sbr.rel (%p613) target = $region52
      $region51: #{speech_embedding.1} parent=47 // pred_region
        _
      $region52: #{speech_embedding.1} parent=47 // pred_fallthru
        _
    $region48: #{speech_embedding.1} parent=5 // pred_fallthru
      _
    %p616 = scmp.le.s32.totalorder 2, %s13
    // Predicated region
    $region53: #{speech_embedding.1} parent=5 // pred_check
      %p617 = pneg %p616
    $region54: #{speech_embedding.1} parent=5 // pred_check_branch
      %619 = sbr.rel (%p617) target = $region56
    $region55: #{speech_embedding.1} parent=5 // pred_region
      %s620 = ssub.s32 %s13, 2
      // Predicated region
      $region57: #{speech_embedding.1} parent=55 // pred_check
        %p621 = pneg %p194
      $region58: #{speech_embedding.1} parent=55 // pred_check_branch
        %623 = sbr.rel (%p621) target = $region60
      $region59: #{speech_embedding.1} parent=55 // pred_region
        %p624 = scmp.lt.s32.totalorder %s19, 1
        %s625 = scalar_select %p624, %s19, 1
        %s626 = smul.addr %s625, 8
        %s627 = scalar_lea.vmem %s7, %s626
      $region60: #{speech_embedding.1} parent=55 // pred_fallthru
        _
    $region56: #{speech_embedding.1} parent=5 // pred_fallthru
      _
  $region6: #{speech_embedding.1} parent=0 // loop_footer
    %s17 = sadd.s32 1, %s13
  $region7: #{speech_embedding.1} parent=0 // loop_footer_branch
    %12 = sbr.rel target = $region3
  $region8: #{speech_embedding.1} parent=0 // loop_exit
    _

</llo_original>
